<compile_context>
chip_gen: v5e
topology: v5e:2x2
jax: 0.10.0
libtpu: 0.0.40
codegen_flags: <defaults>
</compile_context>

<pallas_src>
import jax
import jax.numpy as jnp
from jax.experimental import pallas as pl
from jax.experimental.pallas import tpu as pltpu


# ---------------------------------------------------------------------------
# Kernels
# ---------------------------------------------------------------------------

def _fused_mlp_body(x_ref, w1_ref, b1_ref, w2_ref, b2_ref, out_ref, acc_ref,
                    post_relu):
    """hidden = post_relu(ReLU(x @ W1 + b1)); out = hidden @ W2 + b2.

    Grid = (batch_tiles, k_tiles).  K (= in_features) is a reduction axis:
    the f32 accumulator is zeroed at k == 0 and the epilogue (bias, ReLU,
    dropout hook, second matmul, bias, cast) runs at the last K step.
    """
    k = pl.program_id(1)

    @pl.when(k == 0)
    def _init():
        acc_ref[...] = jnp.zeros_like(acc_ref)

    acc_ref[...] += jnp.dot(x_ref[...], w1_ref[...],
                            preferred_element_type=jnp.float32)

    @pl.when(k == pl.num_programs(1) - 1)
    def _finalize():
        h = jnp.maximum(acc_ref[...] + b1_ref[...], 0.0)     # f32 bias + ReLU
        h = post_relu(h)                                      # dropout hook
        # Explicit precision policy: hidden is re-quantized to the MXU input
        # dtype for the second matmul; accumulation stays f32.
        p = jnp.dot(h.astype(w2_ref.dtype), w2_ref[...],
                    preferred_element_type=jnp.float32)
        out_ref[...] = (p + b2_ref[...]).astype(out_ref.dtype)


def _eval_kernel(x_ref, w1_ref, b1_ref, w2_ref, b2_ref, out_ref, acc_ref):
    # Eval-mode forward: dropout is the identity.
    _fused_mlp_body(x_ref, w1_ref, b1_ref, w2_ref, b2_ref, out_ref, acc_ref,
                    post_relu=lambda h: h)


def _make_mc_bernoulli_kernel(drop_rate):
    """Training-mode / MC-sampling Bernoulli dropout on the hidden layer."""
    inv_keep = 1.0 / (1.0 - drop_rate)

    def kernel(seed_ref, x_ref, w1_ref, b1_ref, w2_ref, b2_ref, out_ref,
               acc_ref):
        def bernoulli_drop(h):
            pltpu.prng_seed(seed_ref[0] + pl.program_id(0))
            bits = pltpu.bitcast(pltpu.prng_random_bits(h.shape), jnp.uint32)
            u = (bits >> 9).astype(jnp.float32) * jnp.float32(1.0 / (1 << 23))
            keep = (u >= jnp.float32(drop_rate)).astype(jnp.float32)
            return h * keep * jnp.float32(inv_keep)

        _fused_mlp_body(x_ref, w1_ref, b1_ref, w2_ref, b2_ref, out_ref,
                        acc_ref, post_relu=bernoulli_drop)

    return kernel


# ---------------------------------------------------------------------------
# Wrapper
# ---------------------------------------------------------------------------

def _round_up(n, m):
    return ((n + m - 1) // m) * m


def _cdiv(a, b):
    return -(-a // b)


def _pad2(a, rows, cols):
    pr, pc = rows - a.shape[0], cols - a.shape[1]
    if pr == 0 and pc == 0:
        return a
    return jnp.pad(a, ((0, pr), (0, pc)))


def mcdrop_classifier(x, w1, b1, w2, b2, *,
                      block_batch=512,
                      k_block=None,
                      compute_dtype=jnp.bfloat16,
                      out_dtype=None,
                      training=False,
                      dropout_rate=0.5,
                      dropout_type="Bernoulli",
                      rng_seed=0):
    """Forward pass of MCdropClassifier.

    x:  [B, in_features]
    w1: [in_features, bottleneck_dim]   (pre-transposed nn.Linear weight)
    b1: [bottleneck_dim] or [1, bottleneck_dim]
    w2: [bottleneck_dim, num_classes]   (pre-transposed nn.Linear weight)
    b2: [num_classes] or [1, num_classes]

    compute_dtype: MXU input dtype (default bf16; accumulation is f32).
    out_dtype:     output dtype (default == compute_dtype, cheap writeback).
    training:      if True, apply MC (Bernoulli) dropout in-kernel.
    """
    B, IN = x.shape
    BOT = w1.shape[1]
    NC = w2.shape[1]
    if out_dtype is None:
        out_dtype = compute_dtype
    if training and dropout_rate > 0.0 and dropout_type != "Bernoulli":
        # TODO(synk): Gaussian MC dropout needs in-kernel normal samples.
        raise NotImplementedError("Gaussian MC dropout not implemented")

    c_itm = jnp.dtype(compute_dtype).itemsize
    o_itm = jnp.dtype(out_dtype).itemsize

    # --- lane-dense padding of the feature dims (zero-fill -> exact) -------
    BOT_P = _round_up(BOT, 128)
    NC_P = _round_up(NC, 128)

    # Sublane-packing row alignment: f32 -> 8, bf16 -> 16, 8-bit -> 32.
    row_align = 8 * max(1, 4 // min(c_itm, o_itm))

    # --- batch tiling: minimal padding; >=2 steps when possible (v7x 2 TCs) -
    if B <= block_batch:
        n_b_target = 2 if B >= 2 * row_align else 1
    else:
        n_b_target = _cdiv(B, block_batch)
    bb = _round_up(_cdiv(B, n_b_target), row_align)

    # --- VMEM budget (per generation) and K (in_features) tiling ------------
    try:
        vmem_phys = int(pltpu.get_tpu_info().vmem_capacity_bytes)
    except Exception:
        vmem_phys = 64 << 20            # assume the smallest (v7x) if unknown
    budget = min((vmem_phys * 3) // 4, 96 << 20)

    def footprint(bb_, tk_, n_k_):
        w1_bufs = 1 if n_k_ == 1 else 2
        return (2 * bb_ * tk_ * c_itm            # x tiles (double-buffered)
                + w1_bufs * tk_ * BOT_P * c_itm  # W1
                + BOT_P * NC_P * c_itm           # W2 (single-buffered)
                + (BOT_P + NC_P) * 4             # biases (f32)
                + 2 * bb_ * NC_P * o_itm         # out tiles
                + 2 * bb_ * BOT_P * 4            # f32 accumulator + hidden
                + bb_ * NC_P * 4)                # f32 pre-cast output temp

    IN_P0 = _round_up(IN, 128)
    tk = IN_P0 if k_block is None else min(_round_up(k_block, 128), IN_P0)
    while footprint(bb, tk, _cdiv(IN_P0, tk)) > budget and tk > 128:
        tk = _round_up(max(tk // 2, 128), 128)
    while footprint(bb, tk, _cdiv(IN_P0, tk)) > budget and bb > row_align:
        bb = _round_up(max(bb // 2, row_align), row_align)

    n_b = max(1, _cdiv(B, bb))
    B_P = n_b * bb
    IN_P = _round_up(IN, tk)
    n_k = IN_P // tk

    # --- wrapper-side layout plumbing (cast first, then zero-pad) -----------
    xp = _pad2(x.astype(compute_dtype), B_P, IN_P)
    w1p = _pad2(w1.astype(compute_dtype), IN_P, BOT_P)
    w2p = _pad2(w2.astype(compute_dtype), BOT_P, NC_P)
    b1p = _pad2(b1.reshape(1, -1).astype(jnp.float32), 1, BOT_P)
    b2p = _pad2(b2.reshape(1, -1).astype(jnp.float32), 1, NC_P)

    # --- cost estimate & VMEM limit -----------------------------------------
    flops = 2 * B_P * (IN_P * BOT_P + BOT_P * NC_P)
    w1_reads = 1 if n_k == 1 else n_b
    bytes_accessed = int(B_P * IN_P * c_itm
                         + w1_reads * IN_P * BOT_P * c_itm
                         + BOT_P * NC_P * c_itm
                         + (BOT_P + NC_P) * 4
                         + B_P * NC_P * o_itm)
    fp = footprint(bb, tk, n_k)
    vmem_limit = int(min(max(2 * fp, 32 << 20, fp + (8 << 20)),
                         vmem_phys - (4 << 20)))

    def _call(single_buffer_weights):
        def _resident(shape):
            # Grid-invariant operand: single-buffer it (halves weight VMEM
            # residency; important on v7x's 64 MiB VMEM).
            if single_buffer_weights:
                try:
                    return pl.BlockSpec(shape, lambda i, k: (0, 0),
                                        pipeline_mode=pl.Buffered(1))
                except TypeError:
                    pass
            return pl.BlockSpec(shape, lambda i, k: (0, 0))

        x_spec = pl.BlockSpec((bb, tk), lambda i, k: (i, k))
        if n_k == 1:
            w1_spec = _resident((tk, BOT_P))
        else:
            w1_spec = pl.BlockSpec((tk, BOT_P), lambda i, k: (k, 0))
        in_specs = [x_spec, w1_spec, _resident((1, BOT_P)),
                    _resident((BOT_P, NC_P)), _resident((1, NC_P))]
        args = [xp, w1p, b1p, w2p, b2p]
        kernel = _eval_kernel
        if training and dropout_rate > 0.0:
            kernel = _make_mc_bernoulli_kernel(float(dropout_rate))
            in_specs = ([pl.BlockSpec(memory_space=pltpu.MemorySpace.SMEM)]
                        + in_specs)
            args = [jnp.asarray([rng_seed], jnp.int32)] + args

        return pl.pallas_call(
            kernel,
            out_shape=jax.ShapeDtypeStruct((B_P, NC_P), out_dtype),
            grid_spec=pltpu.PrefetchScalarGridSpec(
                num_scalar_prefetch=0,
                grid=(n_b, n_k),
                in_specs=in_specs,
                out_specs=pl.BlockSpec((bb, NC_P), lambda i, k: (i, 0)),
                scratch_shapes=[pltpu.VMEM((bb, BOT_P), jnp.float32)],
            ),
            compiler_params=pltpu.CompilerParams(
                dimension_semantics=("parallel", "arbitrary"),
                vmem_limit_bytes=vmem_limit,
            ),
            cost_estimate=pl.CostEstimate(
                flops=flops, transcendentals=0,
                bytes_accessed=bytes_accessed),
        )(*args)

    try:
        out_padded = _call(single_buffer_weights=True)
    except Exception:
        # Safety net: fall back to default double-buffered weight operands.
        out_padded = _call(single_buffer_weights=False)

    return out_padded[:B, :NC]


def init_params(key, in_features, bottleneck_dim, num_classes,
                dtype=jnp.float32):
    """Deterministic PyTorch-Linear-style init (uniform +/- 1/sqrt(fan_in))."""
    k1, k2, k3, k4 = jax.random.split(key, 4)
    bound1 = 1.0 / (in_features ** 0.5)
    bound2 = 1.0 / (bottleneck_dim ** 0.5)
    # Stored pre-transposed: [in, out].
    w1 = jax.random.uniform(k1, (in_features, bottleneck_dim), dtype,
                            minval=-bound1, maxval=bound1)
    b1 = jax.random.uniform(k2, (1, bottleneck_dim), dtype,
                            minval=-bound1, maxval=bound1)
    w2 = jax.random.uniform(k3, (bottleneck_dim, num_classes), dtype,
                            minval=-bound2, maxval=bound2)
    b2 = jax.random.uniform(k4, (1, num_classes), dtype,
                            minval=-bound2, maxval=bound2)
    return w1, b1, w2, b2


if __name__ == "__main__":
    key = jax.random.PRNGKey(0)
    kx1, kx2, kp1, kp2 = jax.random.split(key, 4)

    # --- Case 1 & 2: small shapes, single batch tile, full-K ---------------
    B1, IN1, BOT1, NC1 = 8, 32, 128, 16
    x1 = jax.random.normal(kx1, (B1, IN1), jnp.float32)
    w1, b1, w2, b2 = init_params(kp1, IN1, BOT1, NC1)
    ref1 = jnp.maximum(x1 @ w1 + b1, 0.0) @ w2 + b2

    # f32 MXU path: tight correctness check.
    out_f32 = jax.block_until_ready(
        mcdrop_classifier(x1, w1, b1, w2, b2,
                          compute_dtype=jnp.float32, out_dtype=jnp.float32))
    assert out_f32.shape == (B1, NC1)
    assert jnp.allclose(out_f32, ref1, atol=1e-5, rtol=1e-5)

    # Default path (bf16 MXU inputs, f32 accumulation, bf16 output): loose.
    out_bf16 = jax.block_until_ready(mcdrop_classifier(x1, w1, b1, w2, b2))
    assert out_bf16.shape == (B1, NC1)
    assert out_bf16.dtype == jnp.bfloat16
    assert jnp.allclose(out_bf16.astype(jnp.float32), ref1,
                        atol=7e-2, rtol=7e-2)

    # --- Case 3: multi-step batch grid + K-tiled accumulator (grid (2, 2)) -
    B3, IN3, BOT3, NC3 = 40, 256, 128, 16
    x3 = jax.random.normal(kx2, (B3, IN3), jnp.float32)
    w1c, b1c, w2c, b2c = init_params(kp2, IN3, BOT3, NC3)
    ref3 = jnp.maximum(x3 @ w1c + b1c, 0.0) @ w2c + b2c
    out3 = jax.block_until_ready(
        mcdrop_classifier(x3, w1c, b1c, w2c, b2c,
                          compute_dtype=jnp.float32, out_dtype=jnp.float32,
                          k_block=128))
    assert out3.shape == (B3, NC3)
    assert jnp.allclose(out3, ref3, atol=1e-4, rtol=1e-4)

    print("KERNEL_OK")
</pallas_src>

<mosaic_0001>
module attributes {stable_mosaic.version = 11 : i64} {
  func.func @_eval_kernel(%arg0: i32, %arg1: i32, %arg2: memref<8x128xf32, #tpu.memory_space<vmem>>, %arg3: memref<128x128xf32, #tpu.memory_space<vmem>>, %arg4: memref<1x128xf32, #tpu.memory_space<vmem>>, %arg5: memref<128x128xf32, #tpu.memory_space<vmem>>, %arg6: memref<1x128xf32, #tpu.memory_space<vmem>>, %arg7: memref<8x128xf32, #tpu.memory_space<vmem>>, %arg8: memref<8x128xf32, #tpu.memory_space<vmem>>) attributes {dimension_semantics = [#tpu.dimension_semantics<parallel>, #tpu.dimension_semantics<arbitrary>], iteration_bounds = array<i64: 1, 1>, scalar_prefetch = 0 : i64, scratch_operands = 1 : i64, tpu.core_type = #tpu.core_type<tc>, window_params = [{transform_indices = @transform_0, window_bounds = array<i64: 8, 128>}, {pipeline_mode = #tpu.pipeline_mode<synchronous>, transform_indices = @transform_1, window_bounds = array<i64: 128, 128>}, {pipeline_mode = #tpu.pipeline_mode<synchronous>, transform_indices = @transform_2, window_bounds = array<i64: 1, 128>}, {pipeline_mode = #tpu.pipeline_mode<synchronous>, transform_indices = @transform_3, window_bounds = array<i64: 128, 128>}, {pipeline_mode = #tpu.pipeline_mode<synchronous>, transform_indices = @transform_4, window_bounds = array<i64: 1, 128>}, {transform_indices = @transform_5, window_bounds = array<i64: 8, 128>}]} {
    %c0_i32 = arith.constant 0 : i32
    %0 = arith.cmpi eq, %arg1, %c0_i32 : i32
    %1 = arith.extui %0 : i1 to i32
    %c0_i32_0 = arith.constant 0 : i32
    %2 = arith.cmpi ne, %1, %c0_i32_0 : i32
    scf.if %2 {
      %cst_10 = arith.constant 0.000000e+00 : f32
      %12 = vector.broadcast %cst_10 : f32 to vector<8x128xf32>
      %c0_11 = arith.constant 0 : index
      %c0_12 = arith.constant 0 : index
      %13 = vector.load %arg8[%c0_11, %c0_12] : memref<8x128xf32, #tpu.memory_space<vmem>>, vector<8x128xf32>
      tpu.vector_store %arg8[%c0_11, %c0_12], %12 {strides = array<i32>} : memref<8x128xf32, #tpu.memory_space<vmem>>, vector<8x128xf32>,
    } else {
    }
    %c0 = arith.constant 0 : index
    %c0_1 = arith.constant 0 : index
    %3 = vector.load %arg8[%c0, %c0_1] : memref<8x128xf32, #tpu.memory_space<vmem>>, vector<8x128xf32>
    %c0_2 = arith.constant 0 : index
    %c0_3 = arith.constant 0 : index
    %4 = vector.load %arg2[%c0_2, %c0_3] : memref<8x128xf32, #tpu.memory_space<vmem>>, vector<8x128xf32>
    %c0_4 = arith.constant 0 : index
    %c0_5 = arith.constant 0 : index
    %5 = vector.load %arg3[%c0_4, %c0_5] : memref<128x128xf32, #tpu.memory_space<vmem>>, vector<128x128xf32>
    %cst = arith.constant dense<0.000000e+00> : vector<8x128xf32>
    %6 = tpu.matmul %4, %5, %cst {dimension_numbers = #tpu.dot_dimension_numbers<[1], [0], [0], [1], [0, 0, 1, 1], [], []>} : vector<8x128xf32>, vector<128x128xf32>, vector<8x128xf32> -> vector<8x128xf32>
    %7 = arith.addf %3, %6 : vector<8x128xf32>
    %c0_6 = arith.constant 0 : index
    %c0_7 = arith.constant 0 : index
    %8 = vector.load %arg8[%c0_6, %c0_7] : memref<8x128xf32, #tpu.memory_space<vmem>>, vector<8x128xf32>
    tpu.vector_store %arg8[%c0_6, %c0_7], %7 {strides = array<i32>} : memref<8x128xf32, #tpu.memory_space<vmem>>, vector<8x128xf32>,
    %c0_i32_8 = arith.constant 0 : i32
    %9 = arith.cmpi eq, %arg1, %c0_i32_8 : i32
    %10 = arith.extui %9 : i1 to i32
    %c0_i32_9 = arith.constant 0 : i32
    %11 = arith.cmpi ne, %10, %c0_i32_9 : i32
    scf.if %11 {
      %c0_10 = arith.constant 0 : index
      %c0_11 = arith.constant 0 : index
      %12 = vector.load %arg8[%c0_10, %c0_11] : memref<8x128xf32, #tpu.memory_space<vmem>>, vector<8x128xf32>
      %c0_12 = arith.constant 0 : index
      %c0_13 = arith.constant 0 : index
      %13 = vector.load %arg4[%c0_12, %c0_13] : memref<1x128xf32, #tpu.memory_space<vmem>>, vector<1x128xf32>
      %14 = vector.broadcast %13 : vector<1x128xf32> to vector<8x128xf32>
      %15 = arith.addf %12, %14 : vector<8x128xf32>
      %cst_14 = arith.constant 0.000000e+00 : f32
      %16 = vector.broadcast %cst_14 : f32 to vector<8x128xf32>
      %17 = arith.maximumf %15, %16 : vector<8x128xf32>
      %c0_15 = arith.constant 0 : index
      %c0_16 = arith.constant 0 : index
      %18 = vector.load %arg5[%c0_15, %c0_16] : memref<128x128xf32, #tpu.memory_space<vmem>>, vector<128x128xf32>
      %cst_17 = arith.constant dense<0.000000e+00> : vector<8x128xf32>
      %19 = tpu.matmul %17, %18, %cst_17 {dimension_numbers = #tpu.dot_dimension_numbers<[1], [0], [0], [1], [0, 0, 1, 1], [], []>} : vector<8x128xf32>, vector<128x128xf32>, vector<8x128xf32> -> vector<8x128xf32>
      %c0_18 = arith.constant 0 : index
      %c0_19 = arith.constant 0 : index
      %20 = vector.load %arg6[%c0_18, %c0_19] : memref<1x128xf32, #tpu.memory_space<vmem>>, vector<1x128xf32>
      %21 = vector.broadcast %20 : vector<1x128xf32> to vector<8x128xf32>
      %22 = arith.addf %19, %21 : vector<8x128xf32>
      %c0_20 = arith.constant 0 : index
      %c0_21 = arith.constant 0 : index
      %23 = vector.load %arg7[%c0_20, %c0_21] : memref<8x128xf32, #tpu.memory_space<vmem>>, vector<8x128xf32>
      tpu.vector_store %arg7[%c0_20, %c0_21], %22 {strides = array<i32>} : memref<8x128xf32, #tpu.memory_space<vmem>>, vector<8x128xf32>,
    } else {
    }
    return
  }
  func.func @transform_0(%arg0: i32, %arg1: i32) -> (i32, i32) {
    %c0_i32 = arith.constant 0 : i32
    return %arg0, %arg1 : i32, i32
  }
  func.func @transform_1(%arg0: i32, %arg1: i32) -> (i32, i32) {
    %c0_i32 = arith.constant 0 : i32
    %c0_i32_0 = arith.constant 0 : i32
    %c0_i32_1 = arith.constant 0 : i32
    return %c0_i32, %c0_i32_0 : i32, i32
  }
  func.func @transform_2(%arg0: i32, %arg1: i32) -> (i32, i32) {
    %c0_i32 = arith.constant 0 : i32
    %c0_i32_0 = arith.constant 0 : i32
    %c0_i32_1 = arith.constant 0 : i32
    return %c0_i32, %c0_i32_0 : i32, i32
  }
  func.func @transform_3(%arg0: i32, %arg1: i32) -> (i32, i32) {
    %c0_i32 = arith.constant 0 : i32
    %c0_i32_0 = arith.constant 0 : i32
    %c0_i32_1 = arith.constant 0 : i32
    return %c0_i32, %c0_i32_0 : i32, i32
  }
  func.func @transform_4(%arg0: i32, %arg1: i32) -> (i32, i32) {
    %c0_i32 = arith.constant 0 : i32
    %c0_i32_0 = arith.constant 0 : i32
    %c0_i32_1 = arith.constant 0 : i32
    return %c0_i32, %c0_i32_0 : i32, i32
  }
  func.func @transform_5(%arg0: i32, %arg1: i32) -> (i32, i32) {
    %c0_i32 = arith.constant 0 : i32
    %c0_i32_0 = arith.constant 0 : i32
    return %arg0, %c0_i32 : i32, i32
  }
}

module attributes {stable_mosaic.version = 11 : i64} {
  func.func @_eval_kernel(%arg0: i32, %arg1: i32, %arg2: memref<8x128xf32, #tpu.memory_space<vmem>>, %arg3: memref<128x128xf32, #tpu.memory_space<vmem>>, %arg4: memref<1x128xf32, #tpu.memory_space<vmem>>, %arg5: memref<128x128xf32, #tpu.memory_space<vmem>>, %arg6: memref<1x128xf32, #tpu.memory_space<vmem>>, %arg7: memref<8x128xf32, #tpu.memory_space<vmem>>, %arg8: memref<8x128xf32, #tpu.memory_space<vmem>>) attributes {dimension_semantics = [#tpu.dimension_semantics<parallel>, #tpu.dimension_semantics<arbitrary>], iteration_bounds = array<i64: 1, 1>, scalar_prefetch = 0 : i64, scratch_operands = 1 : i64, tpu.core_type = #tpu.core_type<tc>, window_params = [{transform_indices = @transform_0, window_bounds = array<i64: 8, 128>}, {pipeline_mode = #tpu.pipeline_mode<synchronous>, transform_indices = @transform_1, window_bounds = array<i64: 128, 128>}, {pipeline_mode = #tpu.pipeline_mode<synchronous>, transform_indices = @transform_2, window_bounds = array<i64: 1, 128>}, {pipeline_mode = #tpu.pipeline_mode<synchronous>, transform_indices = @transform_3, window_bounds = array<i64: 128, 128>}, {pipeline_mode = #tpu.pipeline_mode<synchronous>, transform_indices = @transform_4, window_bounds = array<i64: 1, 128>}, {transform_indices = @transform_5, window_bounds = array<i64: 8, 128>}]} {
    %c0_i32 = arith.constant 0 : i32
    %0 = arith.cmpi eq, %arg1, %c0_i32 : i32
    %1 = arith.extui %0 : i1 to i32
    %c0_i32_0 = arith.constant 0 : i32
    %2 = arith.cmpi ne, %1, %c0_i32_0 : i32
    scf.if %2 {
      %cst_10 = arith.constant 0.000000e+00 : f32
      %12 = vector.broadcast %cst_10 : f32 to vector<8x128xf32>
      %c0_11 = arith.constant 0 : index
      %c0_12 = arith.constant 0 : index
      %13 = vector.load %arg8[%c0_11, %c0_12] : memref<8x128xf32, #tpu.memory_space<vmem>>, vector<8x128xf32>
      tpu.vector_store %arg8[%c0_11, %c0_12], %12 {strides = array<i32>} : memref<8x128xf32, #tpu.memory_space<vmem>>, vector<8x128xf32>,
    } else {
    }
    %c0 = arith.constant 0 : index
    %c0_1 = arith.constant 0 : index
    %3 = vector.load %arg8[%c0, %c0_1] : memref<8x128xf32, #tpu.memory_space<vmem>>, vector<8x128xf32>
    %c0_2 = arith.constant 0 : index
    %c0_3 = arith.constant 0 : index
    %4 = vector.load %arg2[%c0_2, %c0_3] : memref<8x128xf32, #tpu.memory_space<vmem>>, vector<8x128xf32>
    %c0_4 = arith.constant 0 : index
    %c0_5 = arith.constant 0 : index
    %5 = vector.load %arg3[%c0_4, %c0_5] : memref<128x128xf32, #tpu.memory_space<vmem>>, vector<128x128xf32>
    %cst = arith.constant dense<0.000000e+00> : vector<8x128xf32>
    %6 = tpu.matmul %4, %5, %cst {dimension_numbers = #tpu.dot_dimension_numbers<[1], [0], [0], [1], [0, 0, 1, 1], [], []>} : vector<8x128xf32>, vector<128x128xf32>, vector<8x128xf32> -> vector<8x128xf32>
    %7 = arith.addf %3, %6 : vector<8x128xf32>
    %c0_6 = arith.constant 0 : index
    %c0_7 = arith.constant 0 : index
    %8 = vector.load %arg8[%c0_6, %c0_7] : memref<8x128xf32, #tpu.memory_space<vmem>>, vector<8x128xf32>
    tpu.vector_store %arg8[%c0_6, %c0_7], %7 {strides = array<i32>} : memref<8x128xf32, #tpu.memory_space<vmem>>, vector<8x128xf32>,
    %c0_i32_8 = arith.constant 0 : i32
    %9 = arith.cmpi eq, %arg1, %c0_i32_8 : i32
    %10 = arith.extui %9 : i1 to i32
    %c0_i32_9 = arith.constant 0 : i32
    %11 = arith.cmpi ne, %10, %c0_i32_9 : i32
    scf.if %11 {
      %c0_10 = arith.constant 0 : index
      %c0_11 = arith.constant 0 : index
      %12 = vector.load %arg8[%c0_10, %c0_11] : memref<8x128xf32, #tpu.memory_space<vmem>>, vector<8x128xf32>
      %c0_12 = arith.constant 0 : index
      %c0_13 = arith.constant 0 : index
      %13 = vector.load %arg4[%c0_12, %c0_13] : memref<1x128xf32, #tpu.memory_space<vmem>>, vector<1x128xf32>
      %14 = vector.broadcast %13 : vector<1x128xf32> to vector<8x128xf32>
      %15 = arith.addf %12, %14 : vector<8x128xf32>
      %cst_14 = arith.constant 0.000000e+00 : f32
      %16 = vector.broadcast %cst_14 : f32 to vector<8x128xf32>
      %17 = arith.maximumf %15, %16 : vector<8x128xf32>
      %c0_15 = arith.constant 0 : index
      %c0_16 = arith.constant 0 : index
      %18 = vector.load %arg5[%c0_15, %c0_16] : memref<128x128xf32, #tpu.memory_space<vmem>>, vector<128x128xf32>
      %cst_17 = arith.constant dense<0.000000e+00> : vector<8x128xf32>
      %19 = tpu.matmul %17, %18, %cst_17 {dimension_numbers = #tpu.dot_dimension_numbers<[1], [0], [0], [1], [0, 0, 1, 1], [], []>} : vector<8x128xf32>, vector<128x128xf32>, vector<8x128xf32> -> vector<8x128xf32>
      %c0_18 = arith.constant 0 : index
      %c0_19 = arith.constant 0 : index
      %20 = vector.load %arg6[%c0_18, %c0_19] : memref<1x128xf32, #tpu.memory_space<vmem>>, vector<1x128xf32>
      %21 = vector.broadcast %20 : vector<1x128xf32> to vector<8x128xf32>
      %22 = arith.addf %19, %21 : vector<8x128xf32>
      %c0_20 = arith.constant 0 : index
      %c0_21 = arith.constant 0 : index
      %23 = vector.load %arg7[%c0_20, %c0_21] : memref<8x128xf32, #tpu.memory_space<vmem>>, vector<8x128xf32>
      tpu.vector_store %arg7[%c0_20, %c0_21], %22 {strides = array<i32>} : memref<8x128xf32, #tpu.memory_space<vmem>>, vector<8x128xf32>,
    } else {
    }
    return
  }
  func.func @transform_0(%arg0: i32, %arg1: i32) -> (i32, i32) {
    %c0_i32 = arith.constant 0 : i32
    return %arg0, %arg1 : i32, i32
  }
  func.func @transform_1(%arg0: i32, %arg1: i32) -> (i32, i32) {
    %c0_i32 = arith.constant 0 : i32
    %c0_i32_0 = arith.constant 0 : i32
    %c0_i32_1 = arith.constant 0 : i32
    return %c0_i32, %c0_i32_0 : i32, i32
  }
  func.func @transform_2(%arg0: i32, %arg1: i32) -> (i32, i32) {
    %c0_i32 = arith.constant 0 : i32
    %c0_i32_0 = arith.constant 0 : i32
    %c0_i32_1 = arith.constant 0 : i32
    return %c0_i32, %c0_i32_0 : i32, i32
  }
  func.func @transform_3(%arg0: i32, %arg1: i32) -> (i32, i32) {
    %c0_i32 = arith.constant 0 : i32
    %c0_i32_0 = arith.constant 0 : i32
    %c0_i32_1 = arith.constant 0 : i32
    return %c0_i32, %c0_i32_0 : i32, i32
  }
  func.func @transform_4(%arg0: i32, %arg1: i32) -> (i32, i32) {
    %c0_i32 = arith.constant 0 : i32
    %c0_i32_0 = arith.constant 0 : i32
    %c0_i32_1 = arith.constant 0 : i32
    return %c0_i32, %c0_i32_0 : i32, i32
  }
  func.func @transform_5(%arg0: i32, %arg1: i32) -> (i32, i32) {
    %c0_i32 = arith.constant 0 : i32
    %c0_i32_0 = arith.constant 0 : i32
    return %arg0, %c0_i32 : i32, i32
  }
}

</mosaic_0001>

<llo_original>
// kernel: tpu_custom_call.1
$region0: #{tpu_custom_call.1}
  #allocation0 [shape = 'u32[]', space=smem, size = 0x4, offset = 0x4, fixed_abs, tag = 'smem constant byte address 0x4 - core index']
  #allocation1 [shape = 'u32[72,128]{1,0:T(1,128)}', space=vmem, size = 0x9000, scoped, tag = 'internal scratch']
  #allocation2 [shape = 'f32[8,128]{1,0:T(8,128)}', space=vmem, size = 0x1000, scoped, tag = 'scratch operand']
  %s0 = inlined_call_operand.hbm [shape: f32[8,128], index: 0, kind: input, shape index: {}]
  %s1 = inlined_call_operand.hbm [shape: f32[128,128], index: 1, kind: input, shape index: {}]
  %s2 = inlined_call_operand.vmem [shape: f32[1,128], index: 2, kind: input, shape index: {}]
  %s3 = inlined_call_operand.hbm [shape: f32[128,128], index: 3, kind: input, shape index: {}]
  %s4 = inlined_call_operand.vmem [shape: f32[1,128], index: 4, kind: input, shape index: {}]
  %s5 = inlined_call_operand.hbm [shape: f32[8,128], index: 5, kind: output, shape index: {}]
  %s6 = sld [smem:[#allocation0]]
  $region50: #{tpu_custom_call.1} parent=0
    _
  %s8 = ssub.s32 1, %s6
  %s9 = scalar_select 0, %s8, %s6
  $region1: #{tpu_custom_call.1} parent=0
    #allocation3 [shape = 'u8[4096]{0}', space=vmem, size = 0x1000, scoped, tag = 'input window, operand 0, single buffered']
    #allocation4 [shape = 's32[1]{0}', space=sflag, size = 0x4, scoped, tag = 'scoped memory for tpu_custom_call.1']
    #allocation5 [shape = 's32[1]{0}', space=sflag, size = 0x4, scoped, tag = 'scoped memory for tpu_custom_call.1']
    #allocation6 [shape = 'u8[65536]{0}', space=vmem, size = 0x10000, scoped, tag = 'input window, operand 1, single buffered']
    #allocation7 [shape = 's32[1]{0}', space=sflag, size = 0x4, scoped, tag = 'scoped memory for tpu_custom_call.1']
    #allocation8 [shape = 'u8[65536]{0}', space=vmem, size = 0x10000, scoped, tag = 'input window, operand 3, single buffered']
    #allocation9 [shape = 'u8[4096]{0}', space=vmem, size = 0x1000, scoped, tag = 'output window, operand 0, single buffered']
    %10 = vsyncpa [#allocation4], 0
    %11 = vsyncpa [#allocation7], 0
    %12 = vsyncpa [#allocation5], 0
    // Predicated region
    $region2: #{tpu_custom_call.1} parent=1 // pred_check
      _
    $region3: #{tpu_custom_call.1} parent=1 // pred_check_branch
      %14 = sbr.rel (0) target = $region5
    $region4: #{tpu_custom_call.1} parent=1 // pred_region
      %16 = vsyncadd [#allocation4], 0
      %s18 = sshll.u32 %s0, 4
      %s19 = int_to_ptr.hbm [resolvable:$true] %s18
      %s20 = sshll.u32 [#allocation3], 4
      %s21 = int_to_ptr.vmem [resolvable:$true] %s20
      %23 = dma.hbm_to_vmem [thread:$0]  %s19, 128, %s21, [#allocation4]
    $region5: #{tpu_custom_call.1} parent=1 // pred_fallthru
      _
    // Predicated region
    $region6: #{tpu_custom_call.1} parent=1 // pred_check
      _
    $region7: #{tpu_custom_call.1} parent=1 // pred_check_branch
      %25 = sbr.rel (0) target = $region9
    $region8: #{tpu_custom_call.1} parent=1 // pred_region
      %27 = vsyncadd [#allocation7], 0
      %s28 = sshll.u32 %s1, 4
      %s29 = int_to_ptr.hbm [resolvable:$true] %s28
      %s30 = sshll.u32 [#allocation6], 4
      %s31 = int_to_ptr.vmem [resolvable:$true] %s30
      %36 = dma.hbm_to_vmem [thread:$0]  %s29, 2048, %s31, [#allocation7], 128, 128, 8
    $region9: #{tpu_custom_call.1} parent=1 // pred_fallthru
      _
    // Predicated region
    $region10: #{tpu_custom_call.1} parent=1 // pred_check
      _
    $region11: #{tpu_custom_call.1} parent=1 // pred_check_branch
      %38 = sbr.rel (0) target = $region13
    $region12: #{tpu_custom_call.1} parent=1 // pred_region
      _
    $region13: #{tpu_custom_call.1} parent=1 // pred_fallthru
      _
    // Predicated region
    $region14: #{tpu_custom_call.1} parent=1 // pred_check
      _
    $region15: #{tpu_custom_call.1} parent=1 // pred_check_branch
      %40 = sbr.rel (0) target = $region17
    $region16: #{tpu_custom_call.1} parent=1 // pred_region
      %42 = vsyncadd [#allocation7], 0
      %s43 = sshll.u32 %s3, 4
      %s44 = int_to_ptr.hbm [resolvable:$true] %s43
      %s45 = sshll.u32 [#allocation8], 4
      %s46 = int_to_ptr.vmem [resolvable:$true] %s45
      %51 = dma.hbm_to_vmem [thread:$0]  %s44, 2048, %s46, [#allocation7], 128, 128, 8
    $region17: #{tpu_custom_call.1} parent=1 // pred_fallthru
      _
    // Predicated region
    $region18: #{tpu_custom_call.1} parent=1 // pred_check
      _
    $region19: #{tpu_custom_call.1} parent=1 // pred_check_branch
      %53 = sbr.rel (0) target = $region21
    $region20: #{tpu_custom_call.1} parent=1 // pred_region
      _
    $region21: #{tpu_custom_call.1} parent=1 // pred_fallthru
      _
    // Predicated region
    $region22: #{tpu_custom_call.1} parent=1 // pred_check
      _
    $region23: #{tpu_custom_call.1} parent=1 // pred_check_branch
      %55 = sbr.rel (0) target = $region25
    $region24: #{tpu_custom_call.1} parent=1 // pred_region
      %57 = dma.done [#allocation4], 128
    $region25: #{tpu_custom_call.1} parent=1 // pred_fallthru
      _
    // Predicated region
    $region26: #{tpu_custom_call.1} parent=1 // pred_check
      _
    $region27: #{tpu_custom_call.1} parent=1 // pred_check_branch
      %59 = sbr.rel (0) target = $region29
    $region28: #{tpu_custom_call.1} parent=1 // pred_region
      %61 = dma.done [#allocation7], 2048
    $region29: #{tpu_custom_call.1} parent=1 // pred_fallthru
      _
    // Predicated region
    $region30: #{tpu_custom_call.1} parent=1 // pred_check
      _
    $region31: #{tpu_custom_call.1} parent=1 // pred_check_branch
      %63 = sbr.rel (0) target = $region33
    $region32: #{tpu_custom_call.1} parent=1 // pred_region
      %65 = dma.done [#allocation7], 2048
    $region33: #{tpu_custom_call.1} parent=1 // pred_fallthru
      _
    %p66 = scmp.eq.s32.totalorder 0, 0
    // Predicated region
    $region34: #{tpu_custom_call.1} parent=1 // pred_check
      %p67 = pneg %p66
    $region35: #{tpu_custom_call.1} parent=1 // pred_check_branch
      %69 = sbr.rel (%p67) target = $region37
    $region36: #{tpu_custom_call.1} parent=1 // pred_region
      %70 = vst [vmem:[#allocation2] sm:$0xff] 0.0
    $region37: #{tpu_custom_call.1} parent=1 // pred_fallthru
      _
    %v71 = vld [vmem:[#allocation2] sm:$0xff]
    %v72 = vld [vmem:[#allocation3] sm:$0xff]
    %v73 = vld [vmem:[#allocation6] sm:$0xff]
    %v74 = vld [vmem:[#allocation6 + $0x8] sm:$0xff]
    %v75 = vld [vmem:[#allocation6 + $0x10] sm:$0xff]
    %v76 = vld [vmem:[#allocation6 + $0x18] sm:$0xff]
    %v77 = vld [vmem:[#allocation6 + $0x20] sm:$0xff]
    %v78 = vld [vmem:[#allocation6 + $0x28] sm:$0xff]
    %v79 = vld [vmem:[#allocation6 + $0x30] sm:$0xff]
    %v80 = vld [vmem:[#allocation6 + $0x38] sm:$0xff]
    %v81 = vld [vmem:[#allocation6 + $0x40] sm:$0xff]
    %v82 = vld [vmem:[#allocation6 + $0x48] sm:$0xff]
    %v83 = vld [vmem:[#allocation6 + $0x50] sm:$0xff]
    %v84 = vld [vmem:[#allocation6 + $0x58] sm:$0xff]
    %v85 = vld [vmem:[#allocation6 + $0x60] sm:$0xff]
    %v86 = vld [vmem:[#allocation6 + $0x68] sm:$0xff]
    %v87 = vld [vmem:[#allocation6 + $0x70] sm:$0xff]
    %v88 = vld [vmem:[#allocation6 + $0x78] sm:$0xff]
    %89 = vmatpush.msra.mxu0 %v88
    %90 = vmatpush.msra.mxu0 %v87
    %91 = vmatpush.msra.mxu0 %v86
    %92 = vmatpush.msra.mxu0 %v85
    %93 = vmatpush.msra.mxu0 %v84
    %94 = vmatpush.msra.mxu0 %v83
    %95 = vmatpush.msra.mxu0 %v82
    %96 = vmatpush.msra.mxu0 %v81
    %97 = vmatpush.msra.mxu0 %v80
    %98 = vmatpush.msra.mxu0 %v79
    %99 = vmatpush.msra.mxu0 %v78
    %100 = vmatpush.msra.mxu0 %v77
    %101 = vmatpush.msra.mxu0 %v76
    %102 = vmatpush.msra.mxu0 %v75
    %103 = vmatpush.msra.mxu0 %v74
    %104 = vmatpush.msra.mxu0 %v73
    %105 = vmatmul.f32.gmra.mxu0 %v72
    %v106 = vpop.f32.mrf.mxu0
    %v107 = vadd.f32 0.0, %v106
    %108 = vdwg.mxu0
    %v109 = vadd.f32 %v71, %v107
    %110 = vst [vmem:[#allocation2] sm:$0xff] %v109
    // Predicated region
    $region38: #{tpu_custom_call.1} parent=1 // pred_check
      %p111 = pneg %p66
    $region39: #{tpu_custom_call.1} parent=1 // pred_check_branch
      %113 = sbr.rel (%p111) target = $region41
    $region40: #{tpu_custom_call.1} parent=1 // pred_region
      %v114 = vld [vmem:[#allocation2] sm:$0xff]
      %v115 = vld [vmem:[%s2] sm:$0x1]
      %v117 = vperm.slane %v115, 0
      %v119 = vadd.f32 %v114, %v117
      %v120 = vmax.f32 %v119, 0.0
      %v121 = vld [vmem:[#allocation8] sm:$0xff]
      %v122 = vld [vmem:[#allocation8 + $0x8] sm:$0xff]
      %v123 = vld [vmem:[#allocation8 + $0x10] sm:$0xff]
      %v124 = vld [vmem:[#allocation8 + $0x18] sm:$0xff]
      %v125 = vld [vmem:[#allocation8 + $0x20] sm:$0xff]
      %v126 = vld [vmem:[#allocation8 + $0x28] sm:$0xff]
      %v127 = vld [vmem:[#allocation8 + $0x30] sm:$0xff]
      %v128 = vld [vmem:[#allocation8 + $0x38] sm:$0xff]
      %v129 = vld [vmem:[#allocation8 + $0x40] sm:$0xff]
      %v130 = vld [vmem:[#allocation8 + $0x48] sm:$0xff]
      %v131 = vld [vmem:[#allocation8 + $0x50] sm:$0xff]
      %v132 = vld [vmem:[#allocation8 + $0x58] sm:$0xff]
      %v133 = vld [vmem:[#allocation8 + $0x60] sm:$0xff]
      %v134 = vld [vmem:[#allocation8 + $0x68] sm:$0xff]
      %v135 = vld [vmem:[#allocation8 + $0x70] sm:$0xff]
      %v136 = vld [vmem:[#allocation8 + $0x78] sm:$0xff]
      %v137 = vld [vmem:[%s4] sm:$0x1]
      %v139 = vperm.slane %v137, 0
      %141 = vmatpush.msra.mxu0 %v136
      %142 = vmatpush.msra.mxu0 %v135
      %143 = vmatpush.msra.mxu0 %v134
      %144 = vmatpush.msra.mxu0 %v133
      %145 = vmatpush.msra.mxu0 %v132
      %146 = vmatpush.msra.mxu0 %v131
      %147 = vmatpush.msra.mxu0 %v130
      %148 = vmatpush.msra.mxu0 %v129
      %149 = vmatpush.msra.mxu0 %v128
      %150 = vmatpush.msra.mxu0 %v127
      %151 = vmatpush.msra.mxu0 %v126
      %152 = vmatpush.msra.mxu0 %v125
      %153 = vmatpush.msra.mxu0 %v124
      %154 = vmatpush.msra.mxu0 %v123
      %155 = vmatpush.msra.mxu0 %v122
      %156 = vmatpush.msra.mxu0 %v121
      %157 = vmatmul.f32.gmra.mxu0 %v120
      %v158 = vpop.f32.mrf.mxu0
      %v159 = vadd.f32 %v139, %v158
      %160 = vdwg.mxu0
      %161 = vst [vmem:[#allocation9] sm:$0xff] %v159
    $region41: #{tpu_custom_call.1} parent=1 // pred_fallthru
      _
    // Predicated region
    $region42: #{tpu_custom_call.1} parent=1 // pred_check
      _
    $region43: #{tpu_custom_call.1} parent=1 // pred_check_branch
      %163 = sbr.rel (0) target = $region45
    $region44: #{tpu_custom_call.1} parent=1 // pred_region
      %165 = vsyncadd [#allocation5], 0
      %s167 = sshll.u32 [#allocation9], 4
      %s168 = int_to_ptr.vmem [resolvable:$true] %s167
      %s169 = sshll.u32 %s5, 4
      %s170 = int_to_ptr.hbm [resolvable:$true] %s169
      %172 = dma.vmem_to_hbm [thread:$0]  %s168, 128, %s170, [#allocation5]
    $region45: #{tpu_custom_call.1} parent=1 // pred_fallthru
      _
    // Predicated region
    $region46: #{tpu_custom_call.1} parent=1 // pred_check
      _
    $region47: #{tpu_custom_call.1} parent=1 // pred_check_branch
      %174 = sbr.rel (0) target = $region49
    $region48: #{tpu_custom_call.1} parent=1 // pred_region
      %176 = dma.done [#allocation5], 128
    $region49: #{tpu_custom_call.1} parent=1 // pred_fallthru
      _
    %177 = vsyncpa [#allocation4], 1
    %178 = vsyncpa [#allocation7], 1
    %179 = vsyncpa [#allocation5], 1

// kernel: tpu_custom_call.1
$region0: #{tpu_custom_call.1}
  #allocation0 [shape = 'u32[]', space=smem, size = 0x4, offset = 0x4, fixed_abs, tag = 'smem constant byte address 0x4 - core index']
  #allocation1 [shape = 'u32[72,128]{1,0:T(1,128)}', space=vmem, size = 0x9000, scoped, tag = 'internal scratch']
  #allocation2 [shape = 'f32[8,128]{1,0:T(8,128)}', space=vmem, size = 0x1000, scoped, tag = 'scratch operand']
  %s0 = inlined_call_operand.hbm [shape: f32[8,128], index: 0, kind: input, shape index: {}]
  %s1 = inlined_call_operand.hbm [shape: f32[128,128], index: 1, kind: input, shape index: {}]
  %s2 = inlined_call_operand.vmem [shape: f32[1,128], index: 2, kind: input, shape index: {}]
  %s3 = inlined_call_operand.hbm [shape: f32[128,128], index: 3, kind: input, shape index: {}]
  %s4 = inlined_call_operand.vmem [shape: f32[1,128], index: 4, kind: input, shape index: {}]
  %s5 = inlined_call_operand.hbm [shape: f32[8,128], index: 5, kind: output, shape index: {}]
  %s6 = sld [smem:[#allocation0]]
  $region50: #{tpu_custom_call.1} parent=0
    _
  %s8 = ssub.s32 1, %s6
  %s9 = scalar_select 0, %s8, %s6
  $region1: #{tpu_custom_call.1} parent=0
    #allocation3 [shape = 'u8[4096]{0}', space=vmem, size = 0x1000, scoped, tag = 'input window, operand 0, single buffered']
    #allocation4 [shape = 's32[1]{0}', space=sflag, size = 0x4, scoped, tag = 'scoped memory for tpu_custom_call.1']
    #allocation5 [shape = 's32[1]{0}', space=sflag, size = 0x4, scoped, tag = 'scoped memory for tpu_custom_call.1']
    #allocation6 [shape = 'u8[65536]{0}', space=vmem, size = 0x10000, scoped, tag = 'input window, operand 1, single buffered']
    #allocation7 [shape = 's32[1]{0}', space=sflag, size = 0x4, scoped, tag = 'scoped memory for tpu_custom_call.1']
    #allocation8 [shape = 'u8[65536]{0}', space=vmem, size = 0x10000, scoped, tag = 'input window, operand 3, single buffered']
    #allocation9 [shape = 'u8[4096]{0}', space=vmem, size = 0x1000, scoped, tag = 'output window, operand 0, single buffered']
    %10 = vsyncpa [#allocation4], 0
    %11 = vsyncpa [#allocation7], 0
    %12 = vsyncpa [#allocation5], 0
    // Predicated region
    $region2: #{tpu_custom_call.1} parent=1 // pred_check
      _
    $region3: #{tpu_custom_call.1} parent=1 // pred_check_branch
      %14 = sbr.rel (0) target = $region5
    $region4: #{tpu_custom_call.1} parent=1 // pred_region
      %16 = vsyncadd [#allocation4], 0
      %s18 = sshll.u32 %s0, 4
      %s19 = int_to_ptr.hbm [resolvable:$true] %s18
      %s20 = sshll.u32 [#allocation3], 4
      %s21 = int_to_ptr.vmem [resolvable:$true] %s20
      %23 = dma.hbm_to_vmem [thread:$0]  %s19, 128, %s21, [#allocation4]
    $region5: #{tpu_custom_call.1} parent=1 // pred_fallthru
      _
    // Predicated region
    $region6: #{tpu_custom_call.1} parent=1 // pred_check
      _
    $region7: #{tpu_custom_call.1} parent=1 // pred_check_branch
      %25 = sbr.rel (0) target = $region9
    $region8: #{tpu_custom_call.1} parent=1 // pred_region
      %27 = vsyncadd [#allocation7], 0
      %s28 = sshll.u32 %s1, 4
      %s29 = int_to_ptr.hbm [resolvable:$true] %s28
      %s30 = sshll.u32 [#allocation6], 4
      %s31 = int_to_ptr.vmem [resolvable:$true] %s30
      %36 = dma.hbm_to_vmem [thread:$0]  %s29, 2048, %s31, [#allocation7], 128, 128, 8
    $region9: #{tpu_custom_call.1} parent=1 // pred_fallthru
      _
    // Predicated region
    $region10: #{tpu_custom_call.1} parent=1 // pred_check
      _
    $region11: #{tpu_custom_call.1} parent=1 // pred_check_branch
      %38 = sbr.rel (0) target = $region13
    $region12: #{tpu_custom_call.1} parent=1 // pred_region
      _
    $region13: #{tpu_custom_call.1} parent=1 // pred_fallthru
      _
    // Predicated region
    $region14: #{tpu_custom_call.1} parent=1 // pred_check
      _
    $region15: #{tpu_custom_call.1} parent=1 // pred_check_branch
      %40 = sbr.rel (0) target = $region17
    $region16: #{tpu_custom_call.1} parent=1 // pred_region
      %42 = vsyncadd [#allocation7], 0
      %s43 = sshll.u32 %s3, 4
      %s44 = int_to_ptr.hbm [resolvable:$true] %s43
      %s45 = sshll.u32 [#allocation8], 4
      %s46 = int_to_ptr.vmem [resolvable:$true] %s45
      %51 = dma.hbm_to_vmem [thread:$0]  %s44, 2048, %s46, [#allocation7], 128, 128, 8
    $region17: #{tpu_custom_call.1} parent=1 // pred_fallthru
      _
    // Predicated region
    $region18: #{tpu_custom_call.1} parent=1 // pred_check
      _
    $region19: #{tpu_custom_call.1} parent=1 // pred_check_branch
      %53 = sbr.rel (0) target = $region21
    $region20: #{tpu_custom_call.1} parent=1 // pred_region
      _
    $region21: #{tpu_custom_call.1} parent=1 // pred_fallthru
      _
    // Predicated region
    $region22: #{tpu_custom_call.1} parent=1 // pred_check
      _
    $region23: #{tpu_custom_call.1} parent=1 // pred_check_branch
      %55 = sbr.rel (0) target = $region25
    $region24: #{tpu_custom_call.1} parent=1 // pred_region
      %57 = dma.done [#allocation4], 128
    $region25: #{tpu_custom_call.1} parent=1 // pred_fallthru
      _
    // Predicated region
    $region26: #{tpu_custom_call.1} parent=1 // pred_check
      _
    $region27: #{tpu_custom_call.1} parent=1 // pred_check_branch
      %59 = sbr.rel (0) target = $region29
    $region28: #{tpu_custom_call.1} parent=1 // pred_region
      %61 = dma.done [#allocation7], 2048
    $region29: #{tpu_custom_call.1} parent=1 // pred_fallthru
      _
    // Predicated region
    $region30: #{tpu_custom_call.1} parent=1 // pred_check
      _
    $region31: #{tpu_custom_call.1} parent=1 // pred_check_branch
      %63 = sbr.rel (0) target = $region33
    $region32: #{tpu_custom_call.1} parent=1 // pred_region
      %65 = dma.done [#allocation7], 2048
    $region33: #{tpu_custom_call.1} parent=1 // pred_fallthru
      _
    %p66 = scmp.eq.s32.totalorder 0, 0
    // Predicated region
    $region34: #{tpu_custom_call.1} parent=1 // pred_check
      %p67 = pneg %p66
    $region35: #{tpu_custom_call.1} parent=1 // pred_check_branch
      %69 = sbr.rel (%p67) target = $region37
    $region36: #{tpu_custom_call.1} parent=1 // pred_region
      %70 = vst [vmem:[#allocation2] sm:$0xff] 0.0
    $region37: #{tpu_custom_call.1} parent=1 // pred_fallthru
      _
    %v71 = vld [vmem:[#allocation2] sm:$0xff]
    %v72 = vld [vmem:[#allocation3] sm:$0xff]
    %v73 = vld [vmem:[#allocation6] sm:$0xff]
    %v74 = vld [vmem:[#allocation6 + $0x8] sm:$0xff]
    %v75 = vld [vmem:[#allocation6 + $0x10] sm:$0xff]
    %v76 = vld [vmem:[#allocation6 + $0x18] sm:$0xff]
    %v77 = vld [vmem:[#allocation6 + $0x20] sm:$0xff]
    %v78 = vld [vmem:[#allocation6 + $0x28] sm:$0xff]
    %v79 = vld [vmem:[#allocation6 + $0x30] sm:$0xff]
    %v80 = vld [vmem:[#allocation6 + $0x38] sm:$0xff]
    %v81 = vld [vmem:[#allocation6 + $0x40] sm:$0xff]
    %v82 = vld [vmem:[#allocation6 + $0x48] sm:$0xff]
    %v83 = vld [vmem:[#allocation6 + $0x50] sm:$0xff]
    %v84 = vld [vmem:[#allocation6 + $0x58] sm:$0xff]
    %v85 = vld [vmem:[#allocation6 + $0x60] sm:$0xff]
    %v86 = vld [vmem:[#allocation6 + $0x68] sm:$0xff]
    %v87 = vld [vmem:[#allocation6 + $0x70] sm:$0xff]
    %v88 = vld [vmem:[#allocation6 + $0x78] sm:$0xff]
    %89 = vmatpush.msra.mxu0 %v88
    %90 = vmatpush.msra.mxu0 %v87
    %91 = vmatpush.msra.mxu0 %v86
    %92 = vmatpush.msra.mxu0 %v85
    %93 = vmatpush.msra.mxu0 %v84
    %94 = vmatpush.msra.mxu0 %v83
    %95 = vmatpush.msra.mxu0 %v82
    %96 = vmatpush.msra.mxu0 %v81
    %97 = vmatpush.msra.mxu0 %v80
    %98 = vmatpush.msra.mxu0 %v79
    %99 = vmatpush.msra.mxu0 %v78
    %100 = vmatpush.msra.mxu0 %v77
    %101 = vmatpush.msra.mxu0 %v76
    %102 = vmatpush.msra.mxu0 %v75
    %103 = vmatpush.msra.mxu0 %v74
    %104 = vmatpush.msra.mxu0 %v73
    %105 = vmatmul.f32.gmra.mxu0 %v72
    %v106 = vpop.f32.mrf.mxu0
    %v107 = vadd.f32 0.0, %v106
    %108 = vdwg.mxu0
    %v109 = vadd.f32 %v71, %v107
    %110 = vst [vmem:[#allocation2] sm:$0xff] %v109
    // Predicated region
    $region38: #{tpu_custom_call.1} parent=1 // pred_check
      %p111 = pneg %p66
    $region39: #{tpu_custom_call.1} parent=1 // pred_check_branch
      %113 = sbr.rel (%p111) target = $region41
    $region40: #{tpu_custom_call.1} parent=1 // pred_region
      %v114 = vld [vmem:[#allocation2] sm:$0xff]
      %v115 = vld [vmem:[%s2] sm:$0x1]
      %v117 = vperm.slane %v115, 0
      %v119 = vadd.f32 %v114, %v117
      %v120 = vmax.f32 %v119, 0.0
      %v121 = vld [vmem:[#allocation8] sm:$0xff]
      %v122 = vld [vmem:[#allocation8 + $0x8] sm:$0xff]
      %v123 = vld [vmem:[#allocation8 + $0x10] sm:$0xff]
      %v124 = vld [vmem:[#allocation8 + $0x18] sm:$0xff]
      %v125 = vld [vmem:[#allocation8 + $0x20] sm:$0xff]
      %v126 = vld [vmem:[#allocation8 + $0x28] sm:$0xff]
      %v127 = vld [vmem:[#allocation8 + $0x30] sm:$0xff]
      %v128 = vld [vmem:[#allocation8 + $0x38] sm:$0xff]
      %v129 = vld [vmem:[#allocation8 + $0x40] sm:$0xff]
      %v130 = vld [vmem:[#allocation8 + $0x48] sm:$0xff]
      %v131 = vld [vmem:[#allocation8 + $0x50] sm:$0xff]
      %v132 = vld [vmem:[#allocation8 + $0x58] sm:$0xff]
      %v133 = vld [vmem:[#allocation8 + $0x60] sm:$0xff]
      %v134 = vld [vmem:[#allocation8 + $0x68] sm:$0xff]
      %v135 = vld [vmem:[#allocation8 + $0x70] sm:$0xff]
      %v136 = vld [vmem:[#allocation8 + $0x78] sm:$0xff]
      %v137 = vld [vmem:[%s4] sm:$0x1]
      %v139 = vperm.slane %v137, 0
      %141 = vmatpush.msra.mxu0 %v136
      %142 = vmatpush.msra.mxu0 %v135
      %143 = vmatpush.msra.mxu0 %v134
      %144 = vmatpush.msra.mxu0 %v133
      %145 = vmatpush.msra.mxu0 %v132
      %146 = vmatpush.msra.mxu0 %v131
      %147 = vmatpush.msra.mxu0 %v130
      %148 = vmatpush.msra.mxu0 %v129
      %149 = vmatpush.msra.mxu0 %v128
      %150 = vmatpush.msra.mxu0 %v127
      %151 = vmatpush.msra.mxu0 %v126
      %152 = vmatpush.msra.mxu0 %v125
      %153 = vmatpush.msra.mxu0 %v124
      %154 = vmatpush.msra.mxu0 %v123
      %155 = vmatpush.msra.mxu0 %v122
      %156 = vmatpush.msra.mxu0 %v121
      %157 = vmatmul.f32.gmra.mxu0 %v120
      %v158 = vpop.f32.mrf.mxu0
      %v159 = vadd.f32 %v139, %v158
      %160 = vdwg.mxu0
      %161 = vst [vmem:[#allocation9] sm:$0xff] %v159
    $region41: #{tpu_custom_call.1} parent=1 // pred_fallthru
      _
    // Predicated region
    $region42: #{tpu_custom_call.1} parent=1 // pred_check
      _
    $region43: #{tpu_custom_call.1} parent=1 // pred_check_branch
      %163 = sbr.rel (0) target = $region45
    $region44: #{tpu_custom_call.1} parent=1 // pred_region
      %165 = vsyncadd [#allocation5], 0
      %s167 = sshll.u32 [#allocation9], 4
      %s168 = int_to_ptr.vmem [resolvable:$true] %s167
      %s169 = sshll.u32 %s5, 4
      %s170 = int_to_ptr.hbm [resolvable:$true] %s169
      %172 = dma.vmem_to_hbm [thread:$0]  %s168, 128, %s170, [#allocation5]
    $region45: #{tpu_custom_call.1} parent=1 // pred_fallthru
      _
    // Predicated region
    $region46: #{tpu_custom_call.1} parent=1 // pred_check
      _
    $region47: #{tpu_custom_call.1} parent=1 // pred_check_branch
      %174 = sbr.rel (0) target = $region49
    $region48: #{tpu_custom_call.1} parent=1 // pred_region
      %176 = dma.done [#allocation5], 128
    $region49: #{tpu_custom_call.1} parent=1 // pred_fallthru
      _
    %177 = vsyncpa [#allocation4], 1
    %178 = vsyncpa [#allocation7], 1
    %179 = vsyncpa [#allocation5], 1

</llo_original>
